<compile_context>
chip_gen: v7x
topology: tpu7x:2x2x1
jax: 0.10.0
libtpu: 0.0.40
codegen_flags: <defaults>
</compile_context>

<pallas_src>
import math

import jax
import jax.numpy as jnp
from jax.experimental import pallas as pl
from jax.experimental.pallas import tpu as pltpu

EPS = 1e-5
LANE = 128
SUBLANE = 8


def _linear_block_kernel(x_ref, w_ref, gb_ref, o_ref, *, n_valid: int,
                         activation: bool):
    # x_ref:  (Np, In)  full (row-padded) batch, full reduction axis (In small)
    # w_ref:  (In, tn)  one Out-tile of the pre-transposed weight
    # gb_ref: (2, tn)   row 0 = gamma, row 1 = beta for this Out-tile
    # o_ref:  (Np, tn)
    #
    # Linear (MXU matmul, f32 accumulation). Linear bias intentionally omitted:
    # BN's batch-mean subtraction cancels it exactly.
    y = jnp.dot(x_ref[...], w_ref[...], preferred_element_type=jnp.float32)

    # Training-mode BatchNorm1d statistics (biased variance) over the real
    # batch rows. Padded rows of x are zero → their y rows are exactly zero and
    # contribute nothing to either sum, so dividing by n_valid is exact.
    inv_n = 1.0 / n_valid
    mean = jnp.sum(y, axis=0, keepdims=True) * inv_n           # (1, tn)
    ex2 = jnp.sum(y * y, axis=0, keepdims=True) * inv_n        # (1, tn)
    var = jnp.maximum(ex2 - mean * mean, 0.0)
    inv_std = jax.lax.rsqrt(var + EPS)                         # EUP

    gb = gb_ref[...].astype(jnp.float32)
    scale = gb[0:1, :] * inv_std                               # (1, tn)
    shift = gb[1:2, :] - mean * scale                          # (1, tn)

    out = y * scale + shift                                    # one FMA / elem
    if activation:
        out = jnp.maximum(out, 0.0)
    o_ref[...] = out.astype(o_ref.dtype)


def linear_block(x, weight_t, gamma, beta, *, activation=True, tn=LANE):
    """Fused Linear -> BatchNorm1d(training) -> ReLU.

    x:        (N, In)
    weight_t: (In, Out)  -- weight pre-transposed ONCE at parameter-prep time
    gamma:    (Out,)
    beta:     (Out,)
    Returns:  (N, Out)

    The linear bias is not an input — with training-mode BN it has zero effect
    on the forward output.
    """
    N, In = x.shape
    assert weight_t.shape[0] == In
    Out = weight_t.shape[1]

    # Lane-dense padding of the feature axis (full-width, unmasked stores).
    out_p = max(Out, tn)
    out_p = ((out_p + LANE - 1) // LANE) * LANE
    tn = min(tn, out_p)
    out_p = ((out_p + tn - 1) // tn) * tn   # ensure tn | out_p

    if out_p != Out:
        pad = out_p - Out
        weight_t = jnp.pad(weight_t, ((0, 0), (0, pad)))
        gamma = jnp.pad(gamma, (0, pad), constant_values=1.0)
        beta = jnp.pad(beta, (0, pad))

    # Sublane padding of the batch axis; zero rows do not perturb BN stats.
    n_p = ((N + SUBLANE - 1) // SUBLANE) * SUBLANE
    if n_p != N:
        x = jnp.pad(x, ((0, n_p - N), (0, 0)))

    gb = jnp.stack([gamma, beta], axis=0)   # (2, out_p): single param DMA

    kernel = lambda *refs: _linear_block_kernel(
        *refs, n_valid=N, activation=activation)

    y = pl.pallas_call(
        kernel,
        out_shape=jax.ShapeDtypeStruct((n_p, out_p), x.dtype),
        grid_spec=pltpu.PrefetchScalarGridSpec(
            num_scalar_prefetch=0,
            grid=(out_p // tn,),
            in_specs=[
                pl.BlockSpec((n_p, In), lambda j: (0, 0)),   # x stays resident
                pl.BlockSpec((In, tn), lambda j: (0, j)),    # weight Out-tile
                pl.BlockSpec((2, tn), lambda j: (0, j)),     # packed gamma/beta
            ],
            out_specs=pl.BlockSpec((n_p, tn), lambda j: (0, j)),
        ),
        compiler_params=pltpu.CompilerParams(
            dimension_semantics=("parallel",),
        ),
    )(x, weight_t, gb)

    return y[:N, :Out]


def reference(x, weight, bias, gamma, beta, activation=True):
    y = x @ weight.T + bias
    mean = y.mean(axis=0, keepdims=True)
    var = ((y - mean) ** 2).mean(axis=0, keepdims=True)
    y = (y - mean) / jnp.sqrt(var + EPS) * gamma + beta
    if activation:
        y = jnp.maximum(y, 0.0)
    return y


if __name__ == "__main__":
    key = jax.random.PRNGKey(0)
    k_x, k_w, k_b = jax.random.split(key, 3)

    N, in_node_num, out_node_num = 8, 32, 16

    x = jax.random.normal(k_x, (N, in_node_num), dtype=jnp.float32)

    # Deterministic parameter init (matches PyG Linear 'kaiming_uniform' bounds):
    w_bound = math.sqrt(1.0 / in_node_num)
    weight = jax.random.uniform(
        k_w, (out_node_num, in_node_num), minval=-w_bound, maxval=w_bound,
        dtype=jnp.float32)
    b_bound = 1.0 / math.sqrt(in_node_num)
    bias = jax.random.uniform(
        k_b, (out_node_num,), minval=-b_bound, maxval=b_bound,
        dtype=jnp.float32)

    # BatchNorm1d defaults: gamma = 1, beta = 0.
    gamma = jnp.ones((out_node_num,), dtype=jnp.float32)
    beta = jnp.zeros((out_node_num,), dtype=jnp.float32)

    # One-time parameter prep: transpose the weight ONCE (not per call).
    weight_t = weight.T   # (In, Out)

    out = linear_block(x, weight_t, gamma, beta, activation=True)
    out = jax.block_until_ready(out)

    # Reference still includes the bias; BN cancels it, so results must match.
    ref = reference(x, weight, bias, gamma, beta, activation=True)
    assert out.shape == (N, out_node_num)
    assert jnp.allclose(out, ref, atol=1e-4, rtol=1e-4), (
        f"max abs err = {jnp.max(jnp.abs(out - ref))}")

    print("KERNEL_OK")
</pallas_src>

<mosaic_0001>
module attributes {stable_mosaic.version = 11 : i64} {
  func.func @_lambda_(%arg0: i32, %arg1: memref<8x32xf32, #tpu.memory_space<vmem>>, %arg2: memref<32x128xf32, #tpu.memory_space<vmem>>, %arg3: memref<2x128xf32, #tpu.memory_space<vmem>>, %arg4: memref<8x128xf32, #tpu.memory_space<vmem>>) attributes {dimension_semantics = [#tpu.dimension_semantics<parallel>], iteration_bounds = array<i64: 1>, scalar_prefetch = 0 : i64, scratch_operands = 0 : i64, tpu.core_type = #tpu.core_type<tc>, window_params = [{pipeline_mode = #tpu.pipeline_mode<synchronous>, transform_indices = @transform_0, window_bounds = array<i64: 8, 32>}, {transform_indices = @transform_1, window_bounds = array<i64: 32, 128>}, {transform_indices = @transform_2, window_bounds = array<i64: 2, 128>}, {transform_indices = @transform_3, window_bounds = array<i64: 8, 128>}]} {
    %c0 = arith.constant 0 : index
    %c0_0 = arith.constant 0 : index
    %0 = vector.load %arg1[%c0, %c0_0] : memref<8x32xf32, #tpu.memory_space<vmem>>, vector<8x32xf32>
    %c0_1 = arith.constant 0 : index
    %c0_2 = arith.constant 0 : index
    %1 = vector.load %arg2[%c0_1, %c0_2] : memref<32x128xf32, #tpu.memory_space<vmem>>, vector<32x128xf32>
    %cst = arith.constant dense<0.000000e+00> : vector<8x128xf32>
    %2 = tpu.matmul %0, %1, %cst {dimension_numbers = #tpu.dot_dimension_numbers<[1], [0], [0], [1], [0, 0, 1, 1], [], []>} : vector<8x32xf32>, vector<32x128xf32>, vector<8x128xf32> -> vector<8x128xf32>
    %cst_3 = arith.constant dense<0.000000e+00> : vector<128xf32>
    %3 = vector.multi_reduction <add>, %2, %cst_3 [0] : vector<8x128xf32> to vector<128xf32>
    %4 = vector.shape_cast %3 : vector<128xf32> to vector<1x128xf32>
    %cst_4 = arith.constant 1.250000e-01 : f32
    %5 = vector.broadcast %cst_4 : f32 to vector<1x128xf32>
    %6 = arith.mulf %4, %5 : vector<1x128xf32>
    %7 = arith.mulf %2, %2 : vector<8x128xf32>
    %cst_5 = arith.constant dense<0.000000e+00> : vector<128xf32>
    %8 = vector.multi_reduction <add>, %7, %cst_5 [0] : vector<8x128xf32> to vector<128xf32>
    %9 = vector.shape_cast %8 : vector<128xf32> to vector<1x128xf32>
    %cst_6 = arith.constant 1.250000e-01 : f32
    %10 = vector.broadcast %cst_6 : f32 to vector<1x128xf32>
    %11 = arith.mulf %9, %10 : vector<1x128xf32>
    %12 = arith.mulf %6, %6 : vector<1x128xf32>
    %13 = arith.subf %11, %12 : vector<1x128xf32>
    %cst_7 = arith.constant 0.000000e+00 : f32
    %14 = vector.broadcast %cst_7 : f32 to vector<1x128xf32>
    %15 = arith.maximumf %13, %14 : vector<1x128xf32>
    %cst_8 = arith.constant 9.99999974E-6 : f32
    %16 = vector.broadcast %cst_8 : f32 to vector<1x128xf32>
    %17 = arith.addf %15, %16 : vector<1x128xf32>
    %18 = math.rsqrt %17 : vector<1x128xf32>
    %c0_9 = arith.constant 0 : index
    %c0_10 = arith.constant 0 : index
    %19 = vector.load %arg3[%c0_9, %c0_10] : memref<2x128xf32, #tpu.memory_space<vmem>>, vector<2x128xf32>
    %20 = vector.extract_strided_slice %19 {offsets = [0, 0], sizes = [1, 128], strides = [1, 1]} : vector<2x128xf32> to vector<1x128xf32>
    %21 = arith.mulf %20, %18 : vector<1x128xf32>
    %22 = vector.extract_strided_slice %19 {offsets = [1, 0], sizes = [1, 128], strides = [1, 1]} : vector<2x128xf32> to vector<1x128xf32>
    %23 = arith.mulf %6, %21 : vector<1x128xf32>
    %24 = arith.subf %22, %23 : vector<1x128xf32>
    %25 = vector.broadcast %21 : vector<1x128xf32> to vector<8x128xf32>
    %26 = arith.mulf %2, %25 : vector<8x128xf32>
    %27 = vector.broadcast %24 : vector<1x128xf32> to vector<8x128xf32>
    %28 = arith.addf %26, %27 : vector<8x128xf32>
    %cst_11 = arith.constant 0.000000e+00 : f32
    %29 = vector.broadcast %cst_11 : f32 to vector<8x128xf32>
    %30 = arith.maximumf %28, %29 : vector<8x128xf32>
    %c0_12 = arith.constant 0 : index
    %c0_13 = arith.constant 0 : index
    %31 = vector.load %arg4[%c0_12, %c0_13] : memref<8x128xf32, #tpu.memory_space<vmem>>, vector<8x128xf32>
    tpu.vector_store %arg4[%c0_12, %c0_13], %30 {strides = array<i32>} : memref<8x128xf32, #tpu.memory_space<vmem>>, vector<8x128xf32>,
    return
  }
  func.func @transform_0(%arg0: i32) -> (i32, i32) {
    %c0_i32 = arith.constant 0 : i32
    %c0_i32_0 = arith.constant 0 : i32
    %c0_i32_1 = arith.constant 0 : i32
    return %c0_i32, %c0_i32_0 : i32, i32
  }
  func.func @transform_1(%arg0: i32) -> (i32, i32) {
    %c0_i32 = arith.constant 0 : i32
    %c0_i32_0 = arith.constant 0 : i32
    return %c0_i32, %arg0 : i32, i32
  }
  func.func @transform_2(%arg0: i32) -> (i32, i32) {
    %c0_i32 = arith.constant 0 : i32
    %c0_i32_0 = arith.constant 0 : i32
    return %c0_i32, %arg0 : i32, i32
  }
  func.func @transform_3(%arg0: i32) -> (i32, i32) {
    %c0_i32 = arith.constant 0 : i32
    %c0_i32_0 = arith.constant 0 : i32
    return %c0_i32, %arg0 : i32, i32
  }
}

</mosaic_0001>

<llo_original>
// kernel: tpu_custom_call.1
$region0: #{tpu_custom_call.1}
  #allocation0 [shape = 'u32[]', space=smem, size = 0x4, offset = 0x4, fixed_abs, tag = 'smem constant byte address 0x4 - core index']
  #allocation1 [shape = 'u32[144,128]{1,0:T(1,128)}', space=vmem, size = 0x12000, scoped, tag = 'internal scratch']
  %s0 = inlined_call_operand.hbm [shape: f32[8,32], index: 0, kind: input, shape index: {}]
  %s1 = inlined_call_operand.hbm [shape: f32[32,128], index: 1, kind: input, shape index: {}]
  %s2 = inlined_call_operand.vmem [shape: f32[2,128], index: 2, kind: input, shape index: {}]
  %s3 = inlined_call_operand.hbm [shape: f32[8,128], index: 3, kind: output, shape index: {}]
  %s4 = sld [smem:[#allocation0]]
  $region30: #{tpu_custom_call.1} parent=0
    _
  %s6 = ssub.s32 1, %s4
  %s7 = scalar_select 0, %s6, %s4
  $region1: #{tpu_custom_call.1} parent=0
    #allocation2 [shape = 'u8[4096]{0}', space=vmem, size = 0x1000, scoped, tag = 'input window, operand 0, single buffered']
    #allocation3 [shape = 's32[1]{0}', space=sflag, size = 0x4, scoped, tag = 'scoped memory for tpu_custom_call.1']
    #allocation4 [shape = 's32[1]{0}', space=sflag, size = 0x4, scoped, tag = 'scoped memory for tpu_custom_call.1']
    #allocation5 [shape = 'u8[16384]{0}', space=vmem, size = 0x4000, scoped, tag = 'input window, operand 1, single buffered']
    #allocation6 [shape = 's32[1]{0}', space=sflag, size = 0x4, scoped, tag = 'scoped memory for tpu_custom_call.1']
    #allocation7 [shape = 'u8[4096]{0}', space=vmem, size = 0x1000, scoped, tag = 'output window, operand 0, single buffered']
    %8 = vsyncpa [#allocation3], 0
    %9 = vsyncpa [#allocation6], 0
    %10 = vsyncpa [#allocation4], 0
    // Predicated region
    $region2: #{tpu_custom_call.1} parent=1 // pred_check
      _
    $region3: #{tpu_custom_call.1} parent=1 // pred_check_branch
      %12 = sbr.rel (0) target = $region5
    $region4: #{tpu_custom_call.1} parent=1 // pred_region
      %s14 = ssub.s32 128, 128
      %15 = vsyncadd [#allocation3], %s14
      %s17 = sshll.u32 [#allocation2], 4
      %s18 = int_to_ptr.vmem [resolvable:$true] %s17
      %20 = dma.hbm_to_vmem [thread:$0]  %s0, 128, %s18, [#allocation3]
    $region5: #{tpu_custom_call.1} parent=1 // pred_fallthru
      _
    // Predicated region
    $region6: #{tpu_custom_call.1} parent=1 // pred_check
      _
    $region7: #{tpu_custom_call.1} parent=1 // pred_check_branch
      %22 = sbr.rel (0) target = $region9
    $region8: #{tpu_custom_call.1} parent=1 // pred_region
      %s24 = ssub.s32 512, 512
      %25 = vsyncadd [#allocation6], %s24
      %s26 = sshll.u32 [#allocation5], 4
      %s27 = int_to_ptr.vmem [resolvable:$true] %s26
      %32 = dma.hbm_to_vmem [thread:$0]  %s1, 512, %s27, [#allocation6], 128, 128, 8
    $region9: #{tpu_custom_call.1} parent=1 // pred_fallthru
      _
    // Predicated region
    $region10: #{tpu_custom_call.1} parent=1 // pred_check
      _
    $region11: #{tpu_custom_call.1} parent=1 // pred_check_branch
      %34 = sbr.rel (0) target = $region13
    $region12: #{tpu_custom_call.1} parent=1 // pred_region
      _
    $region13: #{tpu_custom_call.1} parent=1 // pred_fallthru
      _
    // Predicated region
    $region14: #{tpu_custom_call.1} parent=1 // pred_check
      _
    $region15: #{tpu_custom_call.1} parent=1 // pred_check_branch
      %36 = sbr.rel (0) target = $region17
    $region16: #{tpu_custom_call.1} parent=1 // pred_region
      %37 = dma.done [#allocation3], 128
    $region17: #{tpu_custom_call.1} parent=1 // pred_fallthru
      _
    // Predicated region
    $region18: #{tpu_custom_call.1} parent=1 // pred_check
      _
    $region19: #{tpu_custom_call.1} parent=1 // pred_check_branch
      %39 = sbr.rel (0) target = $region21
    $region20: #{tpu_custom_call.1} parent=1 // pred_region
      %40 = dma.done [#allocation6], 512
    $region21: #{tpu_custom_call.1} parent=1 // pred_fallthru
      _
    %v41 = vld [vmem:[#allocation2] sm:$0xff]
    %v42 = vld [vmem:[#allocation5] sm:$0xff]
    %v43 = vld [vmem:[#allocation5 + $0x8] sm:$0xff]
    %v44 = vld [vmem:[#allocation5 + $0x10] sm:$0xff]
    %v45 = vld [vmem:[#allocation5 + $0x18] sm:$0xff]
    %vm46 = vcmask 261120
    %v48 = vsel %vm46, %v41, 0
    %50 = vmatprep.subr.mxu0 0.0
    %51 = vmatpush1.msra.mxu0 %v42
    %52 = vmatprep.subr.mxu0 0.0
    %53 = vmatpush1.msra.mxu0 %v43
    %54 = vmatprep.subr.mxu0 0.0
    %55 = vmatpush1.msra.mxu0 %v44
    %56 = vmatprep.subr.mxu0 0.0
    %57 = vmatpush1.msra.mxu0 %v45
    %58 = vmatprep.subr.mxu0 0.0
    %59 = vmatpush1.msra.mxu0 0.0
    %60 = vmatprep.subr.mxu0 0.0
    %61 = vmatpush1.msra.mxu0 0.0
    %62 = vmatprep.subr.mxu0 0.0
    %63 = vmatpush1.msra.mxu0 0.0
    %64 = vmatprep.subr.mxu0 0.0
    %65 = vmatpush1.msra.mxu0 0.0
    %66 = vmatprep.subr.mxu0 0.0
    %67 = vmatpush1.msra.mxu0 0.0
    %68 = vmatprep.subr.mxu0 0.0
    %69 = vmatpush1.msra.mxu0 0.0
    %70 = vmatprep.subr.mxu0 0.0
    %71 = vmatpush1.msra.mxu0 0.0
    %72 = vmatprep.subr.mxu0 0.0
    %73 = vmatpush1.msra.mxu0 0.0
    %74 = vmatprep.subr.mxu0 0.0
    %75 = vmatpush1.msra.mxu0 0.0
    %76 = vmatprep.subr.mxu0 0.0
    %77 = vmatpush1.msra.mxu0 0.0
    %78 = vmatprep.subr.mxu0 0.0
    %79 = vmatpush1.msra.mxu0 0.0
    %80 = vmatprep.subr.mxu0 0.0
    %81 = vmatpush1.msra.mxu0 0.0
    %82 = vmatprep.subr.mxu0 0.0
    %83 = vmatpush1.msra.mxu0 0.0
    %84 = vmatprep.subr.mxu0 0.0
    %85 = vmatpush1.msra.mxu0 0.0
    %86 = vmatprep.subr.mxu0 0.0
    %87 = vmatpush1.msra.mxu0 0.0
    %88 = vmatprep.subr.mxu0 0.0
    %89 = vmatpush1.msra.mxu0 0.0
    %90 = vmatprep.subr.mxu0 0.0
    %91 = vmatpush1.msra.mxu0 0.0
    %92 = vmatprep.subr.mxu0 0.0
    %93 = vmatpush1.msra.mxu0 0.0
    %94 = vmatprep.subr.mxu0 0.0
    %95 = vmatpush1.msra.mxu0 0.0
    %96 = vmatprep.subr.mxu0 0.0
    %97 = vmatpush1.msra.mxu0 0.0
    %98 = vmatprep.subr.mxu0 0.0
    %99 = vmatpush1.msra.mxu0 0.0
    %100 = vmatprep.subr.mxu0 0.0
    %101 = vmatpush1.msra.mxu0 0.0
    %102 = vmatprep.subr.mxu0 0.0
    %103 = vmatpush1.msra.mxu0 0.0
    %104 = vmatprep.subr.mxu0 0.0
    %105 = vmatpush1.msra.mxu0 0.0
    %106 = vmatprep.subr.mxu0 0.0
    %107 = vmatpush1.msra.mxu0 0.0
    %108 = vmatprep.subr.mxu0 0.0
    %109 = vmatpush1.msra.mxu0 0.0
    %110 = vmatprep.subr.mxu0 0.0
    %111 = vmatpush1.msra.mxu0 0.0
    %112 = vmatprep.subr.mxu0 0.0
    %113 = vmatpush1.msra.mxu0 0.0
    %114 = vmatprep.mubr.f32.mxu0 0.0
    %115 = vmatmul.mubr.f32.gmra.mrb[0].mxu0 %v48
    %v116 = vpop.f32.mrb[0].mxu0
    %v117 = vadd.f32 0.0, %v116
    %v118 = vpop.f32.mrb[0].mxu0
    %119 = vdwg.mxu0
    %v120 = vrot.slane %v117, 4
    %v121 = vadd.f32 %v117, %v120
    %v122 = vrot.slane %v121, 2
    %v123 = vadd.f32 %v121, %v122
    %v124 = vrot.slane %v123, 1
    %v125 = vadd.f32 %v123, %v124
    %v126 = vmul.f32 %v125, 0.125
    %v127 = vmul.f32 %v117, %v117
    %v128 = vrot.slane %v127, 4
    %v129 = vadd.f32 %v127, %v128
    %v130 = vrot.slane %v129, 2
    %v131 = vadd.f32 %v129, %v130
    %v132 = vrot.slane %v131, 1
    %v133 = vadd.f32 %v131, %v132
    %v134 = vmul.f32 %v133, 0.125
    %v135 = vmul.f32 %v126, %v126
    %v136 = vsub.f32 %v134, %v135
    %v137 = vmax.f32 %v136, 0.0
    %v138 = vadd.f32 %v137, 1e-05
    %v139 = vrsqrt.pop %v138
    %v140 = vld [vmem:[%s2] sm:$0x3]
    %v141 = vmul.f32 %v140, %v139
    %v142 = vmul.f32 %v126, %v141
    %v144 = vrot.slane %v142, 7
    %v146 = vsub.f32 %v140, %v144
    %v147 = vlaneseq
    %v148 = vshrl.u32 %v147, 7
    %v149 = vsub.s32 0, %v148
    %v150 = vrot.slane %v141, %v149
    %v151 = vmul.f32 %v117, %v150
    %v152 = vlaneseq
    %v153 = vshrl.u32 %v152, 7
    %v154 = vsub.s32 1, %v153
    %v155 = vrot.slane %v146, %v154
    %v156 = vadd.f32 %v151, %v155
    %v157 = vmax.f32 %v156, 0.0
    %158 = vst [vmem:[#allocation7] sm:$0xff] %v157
    // Predicated region
    $region22: #{tpu_custom_call.1} parent=1 // pred_check
      _
    $region23: #{tpu_custom_call.1} parent=1 // pred_check_branch
      %160 = sbr.rel (0) target = $region25
    $region24: #{tpu_custom_call.1} parent=1 // pred_region
      %s162 = ssub.s32 128, 128
      %163 = vsyncadd [#allocation4], %s162
      %s165 = sshll.u32 [#allocation7], 4
      %s166 = int_to_ptr.vmem [resolvable:$true] %s165
      %168 = dma.vmem_to_hbm [thread:$0]  %s166, 128, %s3, [#allocation4]
    $region25: #{tpu_custom_call.1} parent=1 // pred_fallthru
      _
    // Predicated region
    $region26: #{tpu_custom_call.1} parent=1 // pred_check
      _
    $region27: #{tpu_custom_call.1} parent=1 // pred_check_branch
      %170 = sbr.rel (0) target = $region29
    $region28: #{tpu_custom_call.1} parent=1 // pred_region
      %171 = dma.done [#allocation4], 128
    $region29: #{tpu_custom_call.1} parent=1 // pred_fallthru
      _
    %172 = vsyncpa [#allocation3], 1
    %173 = vsyncpa [#allocation6], 1
    %174 = vsyncpa [#allocation4], 1

</llo_original>
